<compile_context>
chip_gen: v7x
topology: tpu7x:2x2x1
jax: 0.10.0
libtpu: 0.0.40
codegen_flags: <defaults>
</compile_context>

<pallas_src>
import jax
import jax.numpy as jnp
import numpy as np
from jax import lax
from jax.experimental import pallas as pl
from jax.experimental.pallas import tpu as pltpu


def _traffic_lstm_kernel(x_ref, w_ih_ref, b_ref, w_hh_ref, w_fc_ref, b_fc_ref, out_ref):
    """Whole TrafficLSTM forward (input proj + LSTM recurrence + final FC).

    x_ref:    (T, B, 1)  input sequence, time-major (input_dim == 1).
    w_ih_ref: (1, 4H)    W_ih[:, 0] as a row vector.
    b_ref:    (1, 4H)    b_ih + b_hh.
    w_hh_ref: (H, 4H)    W_hh^T.
    w_fc_ref: (1, H)     final Linear weight row (output_dim == 1).
    b_fc_ref: (1, 1)     final Linear bias.
    out_ref:  (B, 1)     model output.
    """
    T = x_ref.shape[0]
    B = x_ref.shape[1]
    H = w_hh_ref.shape[0]

    # Hoisted: these stay in vregs/VMEM across all timesteps.
    w_hh = w_hh_ref[...]                                   # (H, 4H)
    w_row = w_ih_ref[...]                                  # (1, 4H)
    bias = b_ref[...]                                      # (1, 4H)

    def step(t, carry):
        h, c = carry
        # Input projection folded in (D_in == 1): lane-broadcast multiply + bias,
        # plus the recurrent matmul (single MXU push, f32 accumulation).
        x_t = x_ref[t]                                     # (B, 1)
        gates = (x_t * w_row + bias
                 + jnp.dot(h, w_hh, preferred_element_type=jnp.float32))   # (B, 4H)

        # Two full-tile EUP passes instead of four quarter-tile ones, then slice
        # the (i, f, g, o) gates (PyTorch gate order).
        sig = jax.nn.sigmoid(gates)
        th = jnp.tanh(gates)
        i_g = sig[:, 0 * H:1 * H]
        f_g = sig[:, 1 * H:2 * H]
        g_g = th[:, 2 * H:3 * H]
        o_g = sig[:, 3 * H:4 * H]

        c_new = f_g * c + i_g * g_g
        h_new = o_g * jnp.tanh(c_new)
        return (h_new, c_new)

    h0 = jnp.zeros((B, H), jnp.float32)
    c0 = jnp.zeros((B, H), jnp.float32)
    # T is small (traffic windows); full unroll keeps LLO scheduling visibility.
    # NOTE: if T grows large, switch to unroll=4..8 to bound code size / vreg pressure.
    h_T, _ = lax.fori_loop(0, T, step, (h0, c0), unroll=True)

    # Final Linear fused in: output_dim == 1 -> one XLU lane reduction + bias add.
    out = jnp.sum(h_T * w_fc_ref[...], axis=-1, keepdims=True) + b_fc_ref[...]
    out_ref[...] = out.astype(out_ref.dtype)


def traffic_lstm_forward(x, w_ih, w_hh, b_ih, b_hh, w_fc, b_fc):
    """x: (B, T, 1) float32 (PyTorch batch_first).  Returns (B, 1)."""
    B, T, D_in = x.shape
    H4 = w_ih.shape[0]
    H = H4 // 4
    O = w_fc.shape[0]
    assert D_in == 1, "kernel specialized to input_dim == 1 (module default)"
    assert O == 1, "kernel specialized to output_dim == 1 (module default)"
    assert w_hh.shape == (H4, H)

    # Cheap layout prep (pure reshapes/transposes of tiny parameter tensors).
    x_tm = jnp.transpose(x, (1, 0, 2)).astype(jnp.float32)        # (T, B, 1)
    w_row = w_ih[:, 0].reshape(1, H4).astype(jnp.float32)          # (1, 4H)
    bias = (b_ih + b_hh).reshape(1, H4).astype(jnp.float32)        # (1, 4H)
    w_hh_t = jnp.transpose(w_hh).astype(jnp.float32)               # (H, 4H)
    w_fc_row = w_fc.reshape(1, H).astype(jnp.float32)              # (1, H)
    b_fc_2d = b_fc.reshape(1, 1).astype(jnp.float32)               # (1, 1)

    vmem = lambda: pl.BlockSpec(memory_space=pltpu.MemorySpace.VMEM)
    return pl.pallas_call(
        _traffic_lstm_kernel,
        out_shape=jax.ShapeDtypeStruct((B, 1), jnp.float32),
        in_specs=[vmem() for _ in range(6)],
        out_specs=vmem(),
    )(x_tm, w_row, bias, w_hh_t, w_fc_row, b_fc_2d)


def traffic_lstm_reference(x, w_ih, w_hh, b_ih, b_hh, w_fc, b_fc):
    """Pure-JAX reference reproducing nn.LSTM (batch_first) + nn.Linear."""
    B, T, D_in = x.shape
    H = w_hh.shape[1]

    def step(carry, x_t):
        h, c = carry
        gates = x_t @ w_ih.T + b_ih + h @ w_hh.T + b_hh
        i = jax.nn.sigmoid(gates[:, 0 * H:1 * H])
        f = jax.nn.sigmoid(gates[:, 1 * H:2 * H])
        g = jnp.tanh(gates[:, 2 * H:3 * H])
        o = jax.nn.sigmoid(gates[:, 3 * H:4 * H])
        c = f * c + i * g
        h = o * jnp.tanh(c)
        return (h, c), None

    h0 = jnp.zeros((B, H), jnp.float32)
    c0 = jnp.zeros((B, H), jnp.float32)
    (h_T, _), _ = jax.lax.scan(step, (h0, c0), jnp.transpose(x, (1, 0, 2)))
    return h_T @ w_fc.T + b_fc


if __name__ == "__main__":
    # Module hyperparameters (matching TrafficLSTM defaults).
    input_dim, hidden_dim, num_layers, output_dim = 1, 32, 1, 1
    B, T = 8, 8

    key = jax.random.PRNGKey(0)
    ks = jax.random.split(key, 7)
    scale = 1.0 / np.sqrt(hidden_dim)
    w_ih = jax.random.uniform(ks[0], (4 * hidden_dim, input_dim), jnp.float32, -scale, scale)
    w_hh = jax.random.uniform(ks[1], (4 * hidden_dim, hidden_dim), jnp.float32, -scale, scale)
    b_ih = jax.random.uniform(ks[2], (4 * hidden_dim,), jnp.float32, -scale, scale)
    b_hh = jax.random.uniform(ks[3], (4 * hidden_dim,), jnp.float32, -scale, scale)
    w_fc = jax.random.uniform(ks[4], (output_dim, hidden_dim), jnp.float32, -scale, scale)
    b_fc = jax.random.uniform(ks[5], (output_dim,), jnp.float32, -scale, scale)
    x = jax.random.normal(ks[6], (B, T, input_dim), jnp.float32)

    out = traffic_lstm_forward(x, w_ih, w_hh, b_ih, b_hh, w_fc, b_fc)
    out = jax.block_until_ready(out)

    ref = jax.block_until_ready(
        traffic_lstm_reference(x, w_ih, w_hh, b_ih, b_hh, w_fc, b_fc))
    np.testing.assert_allclose(np.asarray(out), np.asarray(ref), rtol=1e-5, atol=1e-5)

    print("KERNEL_OK")
</pallas_src>

<mosaic_0001>
module attributes {stable_mosaic.version = 11 : i64} {
  func.func @_traffic_lstm_kernel(%arg0: memref<8x8x1xf32, #tpu.memory_space<vmem>>, %arg1: memref<1x128xf32, #tpu.memory_space<vmem>>, %arg2: memref<1x128xf32, #tpu.memory_space<vmem>>, %arg3: memref<32x128xf32, #tpu.memory_space<vmem>>, %arg4: memref<1x32xf32, #tpu.memory_space<vmem>>, %arg5: memref<1x1xf32, #tpu.memory_space<vmem>>, %arg6: memref<8x1xf32, #tpu.memory_space<vmem>>) attributes {dimension_semantics = [], scalar_prefetch = 0 : i64, scratch_operands = 0 : i64, tpu.core_type = #tpu.core_type<tc>} {
    %c0 = arith.constant 0 : index
    %c0_0 = arith.constant 0 : index
    %0 = vector.load %arg3[%c0, %c0_0] : memref<32x128xf32, #tpu.memory_space<vmem>>, vector<32x128xf32>
    %c0_1 = arith.constant 0 : index
    %c0_2 = arith.constant 0 : index
    %1 = vector.load %arg1[%c0_1, %c0_2] : memref<1x128xf32, #tpu.memory_space<vmem>>, vector<1x128xf32>
    %c0_3 = arith.constant 0 : index
    %c0_4 = arith.constant 0 : index
    %2 = vector.load %arg2[%c0_3, %c0_4] : memref<1x128xf32, #tpu.memory_space<vmem>>, vector<1x128xf32>
    %cst = arith.constant 0.000000e+00 : f32
    %3 = vector.broadcast %cst : f32 to vector<8x32xf32>
    %cst_5 = arith.constant 0.000000e+00 : f32
    %4 = vector.broadcast %cst_5 : f32 to vector<8x32xf32>
    %c0_i32 = arith.constant 0 : i32
    %5 = arith.index_cast %c0_i32 : i32 to index
    %c0_6 = arith.constant 0 : index
    %c0_7 = arith.constant 0 : index
    %6 = vector.load %arg0[%5, %c0_6, %c0_7] : memref<8x8x1xf32, #tpu.memory_space<vmem>>, vector<1x8x1xf32>
    %7 = vector.shape_cast %6 : vector<1x8x1xf32> to vector<8x1xf32>
    %8 = vector.broadcast %7 : vector<8x1xf32> to vector<8x128xf32>
    %9 = vector.broadcast %1 : vector<1x128xf32> to vector<8x128xf32>
    %10 = arith.mulf %8, %9 : vector<8x128xf32>
    %11 = vector.broadcast %2 : vector<1x128xf32> to vector<8x128xf32>
    %12 = arith.addf %10, %11 : vector<8x128xf32>
    %cst_8 = arith.constant dense<0.000000e+00> : vector<8x128xf32>
    %13 = tpu.matmul %3, %0, %cst_8 {dimension_numbers = #tpu.dot_dimension_numbers<[1], [0], [0], [1], [0, 0, 1, 1], [], []>} : vector<8x32xf32>, vector<32x128xf32>, vector<8x128xf32> -> vector<8x128xf32>
    %14 = arith.addf %12, %13 : vector<8x128xf32>
    %15 = arith.negf %14 : vector<8x128xf32>
    %16 = math.exp %15 : vector<8x128xf32>
    %cst_9 = arith.constant 1.000000e+00 : f32
    %17 = vector.broadcast %cst_9 : f32 to vector<8x128xf32>
    %18 = arith.addf %17, %16 : vector<8x128xf32>
    %19 = arith.divf %17, %18 : vector<8x128xf32>
    %20 = math.tanh %14 : vector<8x128xf32>
    %21 = vector.extract_strided_slice %19 {offsets = [0, 0], sizes = [8, 32], strides = [1, 1]} : vector<8x128xf32> to vector<8x32xf32>
    %22 = vector.extract_strided_slice %19 {offsets = [0, 32], sizes = [8, 32], strides = [1, 1]} : vector<8x128xf32> to vector<8x32xf32>
    %23 = vector.extract_strided_slice %20 {offsets = [0, 64], sizes = [8, 32], strides = [1, 1]} : vector<8x128xf32> to vector<8x32xf32>
    %24 = vector.extract_strided_slice %19 {offsets = [0, 96], sizes = [8, 32], strides = [1, 1]} : vector<8x128xf32> to vector<8x32xf32>
    %25 = arith.mulf %22, %4 : vector<8x32xf32>
    %26 = arith.mulf %21, %23 : vector<8x32xf32>
    %27 = arith.addf %25, %26 : vector<8x32xf32>
    %28 = math.tanh %27 : vector<8x32xf32>
    %29 = arith.mulf %24, %28 : vector<8x32xf32>
    %c1_i32 = arith.constant 1 : i32
    %30 = arith.index_cast %c1_i32 : i32 to index
    %c0_10 = arith.constant 0 : index
    %c0_11 = arith.constant 0 : index
    %31 = vector.load %arg0[%30, %c0_10, %c0_11] : memref<8x8x1xf32, #tpu.memory_space<vmem>>, vector<1x8x1xf32>
    %32 = vector.shape_cast %31 : vector<1x8x1xf32> to vector<8x1xf32>
    %33 = vector.broadcast %32 : vector<8x1xf32> to vector<8x128xf32>
    %34 = vector.broadcast %1 : vector<1x128xf32> to vector<8x128xf32>
    %35 = arith.mulf %33, %34 : vector<8x128xf32>
    %36 = vector.broadcast %2 : vector<1x128xf32> to vector<8x128xf32>
    %37 = arith.addf %35, %36 : vector<8x128xf32>
    %cst_12 = arith.constant dense<0.000000e+00> : vector<8x128xf32>
    %38 = tpu.matmul %29, %0, %cst_12 {dimension_numbers = #tpu.dot_dimension_numbers<[1], [0], [0], [1], [0, 0, 1, 1], [], []>} : vector<8x32xf32>, vector<32x128xf32>, vector<8x128xf32> -> vector<8x128xf32>
    %39 = arith.addf %37, %38 : vector<8x128xf32>
    %40 = arith.negf %39 : vector<8x128xf32>
    %41 = math.exp %40 : vector<8x128xf32>
    %cst_13 = arith.constant 1.000000e+00 : f32
    %42 = vector.broadcast %cst_13 : f32 to vector<8x128xf32>
    %43 = arith.addf %42, %41 : vector<8x128xf32>
    %44 = arith.divf %42, %43 : vector<8x128xf32>
    %45 = math.tanh %39 : vector<8x128xf32>
    %46 = vector.extract_strided_slice %44 {offsets = [0, 0], sizes = [8, 32], strides = [1, 1]} : vector<8x128xf32> to vector<8x32xf32>
    %47 = vector.extract_strided_slice %44 {offsets = [0, 32], sizes = [8, 32], strides = [1, 1]} : vector<8x128xf32> to vector<8x32xf32>
    %48 = vector.extract_strided_slice %45 {offsets = [0, 64], sizes = [8, 32], strides = [1, 1]} : vector<8x128xf32> to vector<8x32xf32>
    %49 = vector.extract_strided_slice %44 {offsets = [0, 96], sizes = [8, 32], strides = [1, 1]} : vector<8x128xf32> to vector<8x32xf32>
    %50 = arith.mulf %47, %27 : vector<8x32xf32>
    %51 = arith.mulf %46, %48 : vector<8x32xf32>
    %52 = arith.addf %50, %51 : vector<8x32xf32>
    %53 = math.tanh %52 : vector<8x32xf32>
    %54 = arith.mulf %49, %53 : vector<8x32xf32>
    %c2_i32 = arith.constant 2 : i32
    %55 = arith.index_cast %c2_i32 : i32 to index
    %c0_14 = arith.constant 0 : index
    %c0_15 = arith.constant 0 : index
    %56 = vector.load %arg0[%55, %c0_14, %c0_15] : memref<8x8x1xf32, #tpu.memory_space<vmem>>, vector<1x8x1xf32>
    %57 = vector.shape_cast %56 : vector<1x8x1xf32> to vector<8x1xf32>
    %58 = vector.broadcast %57 : vector<8x1xf32> to vector<8x128xf32>
    %59 = vector.broadcast %1 : vector<1x128xf32> to vector<8x128xf32>
    %60 = arith.mulf %58, %59 : vector<8x128xf32>
    %61 = vector.broadcast %2 : vector<1x128xf32> to vector<8x128xf32>
    %62 = arith.addf %60, %61 : vector<8x128xf32>
    %cst_16 = arith.constant dense<0.000000e+00> : vector<8x128xf32>
    %63 = tpu.matmul %54, %0, %cst_16 {dimension_numbers = #tpu.dot_dimension_numbers<[1], [0], [0], [1], [0, 0, 1, 1], [], []>} : vector<8x32xf32>, vector<32x128xf32>, vector<8x128xf32> -> vector<8x128xf32>
    %64 = arith.addf %62, %63 : vector<8x128xf32>
    %65 = arith.negf %64 : vector<8x128xf32>
    %66 = math.exp %65 : vector<8x128xf32>
    %cst_17 = arith.constant 1.000000e+00 : f32
    %67 = vector.broadcast %cst_17 : f32 to vector<8x128xf32>
    %68 = arith.addf %67, %66 : vector<8x128xf32>
    %69 = arith.divf %67, %68 : vector<8x128xf32>
    %70 = math.tanh %64 : vector<8x128xf32>
    %71 = vector.extract_strided_slice %69 {offsets = [0, 0], sizes = [8, 32], strides = [1, 1]} : vector<8x128xf32> to vector<8x32xf32>
    %72 = vector.extract_strided_slice %69 {offsets = [0, 32], sizes = [8, 32], strides = [1, 1]} : vector<8x128xf32> to vector<8x32xf32>
    %73 = vector.extract_strided_slice %70 {offsets = [0, 64], sizes = [8, 32], strides = [1, 1]} : vector<8x128xf32> to vector<8x32xf32>
    %74 = vector.extract_strided_slice %69 {offsets = [0, 96], sizes = [8, 32], strides = [1, 1]} : vector<8x128xf32> to vector<8x32xf32>
    %75 = arith.mulf %72, %52 : vector<8x32xf32>
    %76 = arith.mulf %71, %73 : vector<8x32xf32>
    %77 = arith.addf %75, %76 : vector<8x32xf32>
    %78 = math.tanh %77 : vector<8x32xf32>
    %79 = arith.mulf %74, %78 : vector<8x32xf32>
    %c3_i32 = arith.constant 3 : i32
    %80 = arith.index_cast %c3_i32 : i32 to index
    %c0_18 = arith.constant 0 : index
    %c0_19 = arith.constant 0 : index
    %81 = vector.load %arg0[%80, %c0_18, %c0_19] : memref<8x8x1xf32, #tpu.memory_space<vmem>>, vector<1x8x1xf32>
    %82 = vector.shape_cast %81 : vector<1x8x1xf32> to vector<8x1xf32>
    %83 = vector.broadcast %82 : vector<8x1xf32> to vector<8x128xf32>
    %84 = vector.broadcast %1 : vector<1x128xf32> to vector<8x128xf32>
    %85 = arith.mulf %83, %84 : vector<8x128xf32>
    %86 = vector.broadcast %2 : vector<1x128xf32> to vector<8x128xf32>
    %87 = arith.addf %85, %86 : vector<8x128xf32>
    %cst_20 = arith.constant dense<0.000000e+00> : vector<8x128xf32>
    %88 = tpu.matmul %79, %0, %cst_20 {dimension_numbers = #tpu.dot_dimension_numbers<[1], [0], [0], [1], [0, 0, 1, 1], [], []>} : vector<8x32xf32>, vector<32x128xf32>, vector<8x128xf32> -> vector<8x128xf32>
    %89 = arith.addf %87, %88 : vector<8x128xf32>
    %90 = arith.negf %89 : vector<8x128xf32>
    %91 = math.exp %90 : vector<8x128xf32>
    %cst_21 = arith.constant 1.000000e+00 : f32
    %92 = vector.broadcast %cst_21 : f32 to vector<8x128xf32>
    %93 = arith.addf %92, %91 : vector<8x128xf32>
    %94 = arith.divf %92, %93 : vector<8x128xf32>
    %95 = math.tanh %89 : vector<8x128xf32>
    %96 = vector.extract_strided_slice %94 {offsets = [0, 0], sizes = [8, 32], strides = [1, 1]} : vector<8x128xf32> to vector<8x32xf32>
    %97 = vector.extract_strided_slice %94 {offsets = [0, 32], sizes = [8, 32], strides = [1, 1]} : vector<8x128xf32> to vector<8x32xf32>
    %98 = vector.extract_strided_slice %95 {offsets = [0, 64], sizes = [8, 32], strides = [1, 1]} : vector<8x128xf32> to vector<8x32xf32>
    %99 = vector.extract_strided_slice %94 {offsets = [0, 96], sizes = [8, 32], strides = [1, 1]} : vector<8x128xf32> to vector<8x32xf32>
    %100 = arith.mulf %97, %77 : vector<8x32xf32>
    %101 = arith.mulf %96, %98 : vector<8x32xf32>
    %102 = arith.addf %100, %101 : vector<8x32xf32>
    %103 = math.tanh %102 : vector<8x32xf32>
    %104 = arith.mulf %99, %103 : vector<8x32xf32>
    %c4_i32 = arith.constant 4 : i32
    %105 = arith.index_cast %c4_i32 : i32 to index
    %c0_22 = arith.constant 0 : index
    %c0_23 = arith.constant 0 : index
    %106 = vector.load %arg0[%105, %c0_22, %c0_23] : memref<8x8x1xf32, #tpu.memory_space<vmem>>, vector<1x8x1xf32>
    %107 = vector.shape_cast %106 : vector<1x8x1xf32> to vector<8x1xf32>
    %108 = vector.broadcast %107 : vector<8x1xf32> to vector<8x128xf32>
    %109 = vector.broadcast %1 : vector<1x128xf32> to vector<8x128xf32>
    %110 = arith.mulf %108, %109 : vector<8x128xf32>
    %111 = vector.broadcast %2 : vector<1x128xf32> to vector<8x128xf32>
    %112 = arith.addf %110, %111 : vector<8x128xf32>
    %cst_24 = arith.constant dense<0.000000e+00> : vector<8x128xf32>
    %113 = tpu.matmul %104, %0, %cst_24 {dimension_numbers = #tpu.dot_dimension_numbers<[1], [0], [0], [1], [0, 0, 1, 1], [], []>} : vector<8x32xf32>, vector<32x128xf32>, vector<8x128xf32> -> vector<8x128xf32>
    %114 = arith.addf %112, %113 : vector<8x128xf32>
    %115 = arith.negf %114 : vector<8x128xf32>
    %116 = math.exp %115 : vector<8x128xf32>
    %cst_25 = arith.constant 1.000000e+00 : f32
    %117 = vector.broadcast %cst_25 : f32 to vector<8x128xf32>
    %118 = arith.addf %117, %116 : vector<8x128xf32>
    %119 = arith.divf %117, %118 : vector<8x128xf32>
    %120 = math.tanh %114 : vector<8x128xf32>
    %121 = vector.extract_strided_slice %119 {offsets = [0, 0], sizes = [8, 32], strides = [1, 1]} : vector<8x128xf32> to vector<8x32xf32>
    %122 = vector.extract_strided_slice %119 {offsets = [0, 32], sizes = [8, 32], strides = [1, 1]} : vector<8x128xf32> to vector<8x32xf32>
    %123 = vector.extract_strided_slice %120 {offsets = [0, 64], sizes = [8, 32], strides = [1, 1]} : vector<8x128xf32> to vector<8x32xf32>
    %124 = vector.extract_strided_slice %119 {offsets = [0, 96], sizes = [8, 32], strides = [1, 1]} : vector<8x128xf32> to vector<8x32xf32>
    %125 = arith.mulf %122, %102 : vector<8x32xf32>
    %126 = arith.mulf %121, %123 : vector<8x32xf32>
    %127 = arith.addf %125, %126 : vector<8x32xf32>
    %128 = math.tanh %127 : vector<8x32xf32>
    %129 = arith.mulf %124, %128 : vector<8x32xf32>
    %c5_i32 = arith.constant 5 : i32
    %130 = arith.index_cast %c5_i32 : i32 to index
    %c0_26 = arith.constant 0 : index
    %c0_27 = arith.constant 0 : index
    %131 = vector.load %arg0[%130, %c0_26, %c0_27] : memref<8x8x1xf32, #tpu.memory_space<vmem>>, vector<1x8x1xf32>
    %132 = vector.shape_cast %131 : vector<1x8x1xf32> to vector<8x1xf32>
    %133 = vector.broadcast %132 : vector<8x1xf32> to vector<8x128xf32>
    %134 = vector.broadcast %1 : vector<1x128xf32> to vector<8x128xf32>
    %135 = arith.mulf %133, %134 : vector<8x128xf32>
    %136 = vector.broadcast %2 : vector<1x128xf32> to vector<8x128xf32>
    %137 = arith.addf %135, %136 : vector<8x128xf32>
    %cst_28 = arith.constant dense<0.000000e+00> : vector<8x128xf32>
    %138 = tpu.matmul %129, %0, %cst_28 {dimension_numbers = #tpu.dot_dimension_numbers<[1], [0], [0], [1], [0, 0, 1, 1], [], []>} : vector<8x32xf32>, vector<32x128xf32>, vector<8x128xf32> -> vector<8x128xf32>
    %139 = arith.addf %137, %138 : vector<8x128xf32>
    %140 = arith.negf %139 : vector<8x128xf32>
    %141 = math.exp %140 : vector<8x128xf32>
    %cst_29 = arith.constant 1.000000e+00 : f32
    %142 = vector.broadcast %cst_29 : f32 to vector<8x128xf32>
    %143 = arith.addf %142, %141 : vector<8x128xf32>
    %144 = arith.divf %142, %143 : vector<8x128xf32>
    %145 = math.tanh %139 : vector<8x128xf32>
    %146 = vector.extract_strided_slice %144 {offsets = [0, 0], sizes = [8, 32], strides = [1, 1]} : vector<8x128xf32> to vector<8x32xf32>
    %147 = vector.extract_strided_slice %144 {offsets = [0, 32], sizes = [8, 32], strides = [1, 1]} : vector<8x128xf32> to vector<8x32xf32>
    %148 = vector.extract_strided_slice %145 {offsets = [0, 64], sizes = [8, 32], strides = [1, 1]} : vector<8x128xf32> to vector<8x32xf32>
    %149 = vector.extract_strided_slice %144 {offsets = [0, 96], sizes = [8, 32], strides = [1, 1]} : vector<8x128xf32> to vector<8x32xf32>
    %150 = arith.mulf %147, %127 : vector<8x32xf32>
    %151 = arith.mulf %146, %148 : vector<8x32xf32>
    %152 = arith.addf %150, %151 : vector<8x32xf32>
    %153 = math.tanh %152 : vector<8x32xf32>
    %154 = arith.mulf %149, %153 : vector<8x32xf32>
    %c6_i32 = arith.constant 6 : i32
    %155 = arith.index_cast %c6_i32 : i32 to index
    %c0_30 = arith.constant 0 : index
    %c0_31 = arith.constant 0 : index
    %156 = vector.load %arg0[%155, %c0_30, %c0_31] : memref<8x8x1xf32, #tpu.memory_space<vmem>>, vector<1x8x1xf32>
    %157 = vector.shape_cast %156 : vector<1x8x1xf32> to vector<8x1xf32>
    %158 = vector.broadcast %157 : vector<8x1xf32> to vector<8x128xf32>
    %159 = vector.broadcast %1 : vector<1x128xf32> to vector<8x128xf32>
    %160 = arith.mulf %158, %159 : vector<8x128xf32>
    %161 = vector.broadcast %2 : vector<1x128xf32> to vector<8x128xf32>
    %162 = arith.addf %160, %161 : vector<8x128xf32>
    %cst_32 = arith.constant dense<0.000000e+00> : vector<8x128xf32>
    %163 = tpu.matmul %154, %0, %cst_32 {dimension_numbers = #tpu.dot_dimension_numbers<[1], [0], [0], [1], [0, 0, 1, 1], [], []>} : vector<8x32xf32>, vector<32x128xf32>, vector<8x128xf32> -> vector<8x128xf32>
    %164 = arith.addf %162, %163 : vector<8x128xf32>
    %165 = arith.negf %164 : vector<8x128xf32>
    %166 = math.exp %165 : vector<8x128xf32>
    %cst_33 = arith.constant 1.000000e+00 : f32
    %167 = vector.broadcast %cst_33 : f32 to vector<8x128xf32>
    %168 = arith.addf %167, %166 : vector<8x128xf32>
    %169 = arith.divf %167, %168 : vector<8x128xf32>
    %170 = math.tanh %164 : vector<8x128xf32>
    %171 = vector.extract_strided_slice %169 {offsets = [0, 0], sizes = [8, 32], strides = [1, 1]} : vector<8x128xf32> to vector<8x32xf32>
    %172 = vector.extract_strided_slice %169 {offsets = [0, 32], sizes = [8, 32], strides = [1, 1]} : vector<8x128xf32> to vector<8x32xf32>
    %173 = vector.extract_strided_slice %170 {offsets = [0, 64], sizes = [8, 32], strides = [1, 1]} : vector<8x128xf32> to vector<8x32xf32>
    %174 = vector.extract_strided_slice %169 {offsets = [0, 96], sizes = [8, 32], strides = [1, 1]} : vector<8x128xf32> to vector<8x32xf32>
    %175 = arith.mulf %172, %152 : vector<8x32xf32>
    %176 = arith.mulf %171, %173 : vector<8x32xf32>
    %177 = arith.addf %175, %176 : vector<8x32xf32>
    %178 = math.tanh %177 : vector<8x32xf32>
    %179 = arith.mulf %174, %178 : vector<8x32xf32>
    %c7_i32 = arith.constant 7 : i32
    %180 = arith.index_cast %c7_i32 : i32 to index
    %c0_34 = arith.constant 0 : index
    %c0_35 = arith.constant 0 : index
    %181 = vector.load %arg0[%180, %c0_34, %c0_35] : memref<8x8x1xf32, #tpu.memory_space<vmem>>, vector<1x8x1xf32>
    %182 = vector.shape_cast %181 : vector<1x8x1xf32> to vector<8x1xf32>
    %183 = vector.broadcast %182 : vector<8x1xf32> to vector<8x128xf32>
    %184 = vector.broadcast %1 : vector<1x128xf32> to vector<8x128xf32>
    %185 = arith.mulf %183, %184 : vector<8x128xf32>
    %186 = vector.broadcast %2 : vector<1x128xf32> to vector<8x128xf32>
    %187 = arith.addf %185, %186 : vector<8x128xf32>
    %cst_36 = arith.constant dense<0.000000e+00> : vector<8x128xf32>
    %188 = tpu.matmul %179, %0, %cst_36 {dimension_numbers = #tpu.dot_dimension_numbers<[1], [0], [0], [1], [0, 0, 1, 1], [], []>} : vector<8x32xf32>, vector<32x128xf32>, vector<8x128xf32> -> vector<8x128xf32>
    %189 = arith.addf %187, %188 : vector<8x128xf32>
    %190 = arith.negf %189 : vector<8x128xf32>
    %191 = math.exp %190 : vector<8x128xf32>
    %cst_37 = arith.constant 1.000000e+00 : f32
    %192 = vector.broadcast %cst_37 : f32 to vector<8x128xf32>
    %193 = arith.addf %192, %191 : vector<8x128xf32>
    %194 = arith.divf %192, %193 : vector<8x128xf32>
    %195 = math.tanh %189 : vector<8x128xf32>
    %196 = vector.extract_strided_slice %194 {offsets = [0, 0], sizes = [8, 32], strides = [1, 1]} : vector<8x128xf32> to vector<8x32xf32>
    %197 = vector.extract_strided_slice %194 {offsets = [0, 32], sizes = [8, 32], strides = [1, 1]} : vector<8x128xf32> to vector<8x32xf32>
    %198 = vector.extract_strided_slice %195 {offsets = [0, 64], sizes = [8, 32], strides = [1, 1]} : vector<8x128xf32> to vector<8x32xf32>
    %199 = vector.extract_strided_slice %194 {offsets = [0, 96], sizes = [8, 32], strides = [1, 1]} : vector<8x128xf32> to vector<8x32xf32>
    %200 = arith.mulf %197, %177 : vector<8x32xf32>
    %201 = arith.mulf %196, %198 : vector<8x32xf32>
    %202 = arith.addf %200, %201 : vector<8x32xf32>
    %203 = math.tanh %202 : vector<8x32xf32>
    %204 = arith.mulf %199, %203 : vector<8x32xf32>
    %c8_i32 = arith.constant 8 : i32
    %c0_38 = arith.constant 0 : index
    %c0_39 = arith.constant 0 : index
    %205 = vector.load %arg4[%c0_38, %c0_39] : memref<1x32xf32, #tpu.memory_space<vmem>>, vector<1x32xf32>
    %206 = vector.broadcast %205 : vector<1x32xf32> to vector<8x32xf32>
    %207 = arith.mulf %204, %206 : vector<8x32xf32>
    %cst_40 = arith.constant dense<0.000000e+00> : vector<8xf32>
    %208 = vector.multi_reduction <add>, %207, %cst_40 [1] : vector<8x32xf32> to vector<8xf32>
    %209 = vector.shape_cast %208 : vector<8xf32> to vector<8x1xf32>
    %c0_41 = arith.constant 0 : index
    %c0_42 = arith.constant 0 : index
    %210 = vector.load %arg5[%c0_41, %c0_42] : memref<1x1xf32, #tpu.memory_space<vmem>>, vector<1x1xf32>
    %211 = vector.broadcast %210 : vector<1x1xf32> to vector<8x1xf32>
    %212 = arith.addf %209, %211 : vector<8x1xf32>
    %c0_43 = arith.constant 0 : index
    %c0_44 = arith.constant 0 : index
    %213 = vector.load %arg6[%c0_43, %c0_44] : memref<8x1xf32, #tpu.memory_space<vmem>>, vector<8x1xf32>
    tpu.vector_store %arg6[%c0_43, %c0_44], %212 {strides = array<i32>} : memref<8x1xf32, #tpu.memory_space<vmem>>, vector<8x1xf32>,
    return
  }
}

</mosaic_0001>

<llo_original>
// kernel: tpu_custom_call.1
$region0: #{tpu_custom_call.1}
  #allocation0 [shape = 'u32[]', space=smem, size = 0x4, offset = 0x4, fixed_abs, tag = 'smem constant byte address 0x4 - core index']
  #allocation1 [shape = 'u32[144,128]{1,0:T(1,128)}', space=vmem, size = 0x12000, scoped, tag = 'internal scratch']
  #allocation2 [shape = 'f32[1,1]{1,0:T(1,128)S(1)}', space=vmem, size = 0x200, scoped, tag = 'scoped memory for tpu_custom_call.1']
  %s0 = inlined_call_operand.vmem [shape: f32[8,8,1], index: 0, kind: input, shape index: {}]
  %s1 = inlined_call_operand.vmem [shape: f32[1,128], index: 1, kind: input, shape index: {}]
  %s2 = inlined_call_operand.vmem [shape: f32[1,128], index: 2, kind: input, shape index: {}]
  %s3 = inlined_call_operand.vmem [shape: f32[32,128], index: 3, kind: input, shape index: {}]
  %s4 = inlined_call_operand.vmem [shape: f32[1,32], index: 4, kind: input, shape index: {}]
  %s5 = inlined_call_operand.<no memory space> [shape: f32[1,1], index: 5, kind: input, shape index: {}]
  %s6 = inlined_call_operand.vmem [shape: f32[8,1], index: 6, kind: output, shape index: {}]
  %s7 = sld [smem:[#allocation0]]
  $region34: #{tpu_custom_call.1} parent=0
    _
  %s9 = ssub.s32 1, %s7
  %s10 = scalar_select 0, %s9, %s7
  %v11 = vstv %s5
  %12 = vst [vmem:[#allocation2] sm:$0x1] %v11
  // Predicated region
  $region2: #{tpu_custom_call.1} parent=0 // pred_check
    _
  $region3: #{tpu_custom_call.1} parent=0 // pred_check_branch
    %14 = sbr.rel (0) target = $region5
  $region4: #{tpu_custom_call.1} parent=0 // pred_region
    _
  $region5: #{tpu_custom_call.1} parent=0 // pred_fallthru
    _
  // Predicated region
  $region6: #{tpu_custom_call.1} parent=0 // pred_check
    _
  $region7: #{tpu_custom_call.1} parent=0 // pred_check_branch
    %16 = sbr.rel (0) target = $region9
  $region8: #{tpu_custom_call.1} parent=0 // pred_region
    _
  $region9: #{tpu_custom_call.1} parent=0 // pred_fallthru
    _
  // Predicated region
  $region10: #{tpu_custom_call.1} parent=0 // pred_check
    _
  $region11: #{tpu_custom_call.1} parent=0 // pred_check_branch
    %18 = sbr.rel (0) target = $region13
  $region12: #{tpu_custom_call.1} parent=0 // pred_region
    _
  $region13: #{tpu_custom_call.1} parent=0 // pred_fallthru
    _
  // Predicated region
  $region14: #{tpu_custom_call.1} parent=0 // pred_check
    _
  $region15: #{tpu_custom_call.1} parent=0 // pred_check_branch
    %20 = sbr.rel (0) target = $region17
  $region16: #{tpu_custom_call.1} parent=0 // pred_region
    _
  $region17: #{tpu_custom_call.1} parent=0 // pred_fallthru
    _
  // Predicated region
  $region18: #{tpu_custom_call.1} parent=0 // pred_check
    _
  $region19: #{tpu_custom_call.1} parent=0 // pred_check_branch
    %22 = sbr.rel (0) target = $region21
  $region20: #{tpu_custom_call.1} parent=0 // pred_region
    _
  $region21: #{tpu_custom_call.1} parent=0 // pred_fallthru
    _
  // Predicated region
  $region22: #{tpu_custom_call.1} parent=0 // pred_check
    _
  $region23: #{tpu_custom_call.1} parent=0 // pred_check_branch
    %24 = sbr.rel (0) target = $region25
  $region24: #{tpu_custom_call.1} parent=0 // pred_region
    _
  $region25: #{tpu_custom_call.1} parent=0 // pred_fallthru
    _
  %v25 = vld [vmem:[%s3] sm:$0xff]
  %v26 = vld [vmem:[%s3 + $0x8] sm:$0xff]
  %v27 = vld [vmem:[%s3 + $0x10] sm:$0xff]
  %v28 = vld [vmem:[%s3 + $0x18] sm:$0xff]
  %v29 = vld [vmem:[%s1] sm:$0x1]
  %v30 = vld [vmem:[%s2] sm:$0x1]
  %v31 = vld [vmem:[%s0] sm:$0xff]
  %33 = vset.pattern.permute.xlu0 0
  %34 = vperm.xlu0 %33, %v31
  %v35 = vpop.permute.xlu0 %34
  %v38 = vlaneseq
  %v39 = vshrl.u32 %v38, 7
  %v40 = vsub.s32 0, %v39
  %v41 = vrot.slane %v29, %v40
  %v43 = vmul.f32 %v35, %v41
  %v45 = vlaneseq
  %v46 = vshrl.u32 %v45, 7
  %v47 = vsub.s32 0, %v46
  %v48 = vrot.slane %v30, %v47
  %v50 = vadd.f32 %v43, %v48
  %vm51 = vcmask 261120
  %v53 = vsel %vm51, 0.0, 0
  %55 = vmatprep.subr.mxu0 0.0
  %56 = vmatpush1.msra.mxu0 %v25
  %57 = vmatprep.subr.mxu0 0.0
  %58 = vmatpush1.msra.mxu0 %v26
  %59 = vmatprep.subr.mxu0 0.0
  %60 = vmatpush1.msra.mxu0 %v27
  %61 = vmatprep.subr.mxu0 0.0
  %62 = vmatpush1.msra.mxu0 %v28
  %63 = vmatprep.subr.mxu0 0.0
  %64 = vmatpush1.msra.mxu0 0.0
  %65 = vmatprep.subr.mxu0 0.0
  %66 = vmatpush1.msra.mxu0 0.0
  %67 = vmatprep.subr.mxu0 0.0
  %68 = vmatpush1.msra.mxu0 0.0
  %69 = vmatprep.subr.mxu0 0.0
  %70 = vmatpush1.msra.mxu0 0.0
  %71 = vmatprep.subr.mxu0 0.0
  %72 = vmatpush1.msra.mxu0 0.0
  %73 = vmatprep.subr.mxu0 0.0
  %74 = vmatpush1.msra.mxu0 0.0
  %75 = vmatprep.subr.mxu0 0.0
  %76 = vmatpush1.msra.mxu0 0.0
  %77 = vmatprep.subr.mxu0 0.0
  %78 = vmatpush1.msra.mxu0 0.0
  %79 = vmatprep.subr.mxu0 0.0
  %80 = vmatpush1.msra.mxu0 0.0
  %81 = vmatprep.subr.mxu0 0.0
  %82 = vmatpush1.msra.mxu0 0.0
  %83 = vmatprep.subr.mxu0 0.0
  %84 = vmatpush1.msra.mxu0 0.0
  %85 = vmatprep.subr.mxu0 0.0
  %86 = vmatpush1.msra.mxu0 0.0
  %87 = vmatprep.subr.mxu0 0.0
  %88 = vmatpush1.msra.mxu0 0.0
  %89 = vmatprep.subr.mxu0 0.0
  %90 = vmatpush1.msra.mxu0 0.0
  %91 = vmatprep.subr.mxu0 0.0
  %92 = vmatpush1.msra.mxu0 0.0
  %93 = vmatprep.subr.mxu0 0.0
  %94 = vmatpush1.msra.mxu0 0.0
  %95 = vmatprep.subr.mxu0 0.0
  %96 = vmatpush1.msra.mxu0 0.0
  %97 = vmatprep.subr.mxu0 0.0
  %98 = vmatpush1.msra.mxu0 0.0
  %99 = vmatprep.subr.mxu0 0.0
  %100 = vmatpush1.msra.mxu0 0.0
  %101 = vmatprep.subr.mxu0 0.0
  %102 = vmatpush1.msra.mxu0 0.0
  %103 = vmatprep.subr.mxu0 0.0
  %104 = vmatpush1.msra.mxu0 0.0
  %105 = vmatprep.subr.mxu0 0.0
  %106 = vmatpush1.msra.mxu0 0.0
  %107 = vmatprep.subr.mxu0 0.0
  %108 = vmatpush1.msra.mxu0 0.0
  %109 = vmatprep.subr.mxu0 0.0
  %110 = vmatpush1.msra.mxu0 0.0
  %111 = vmatprep.subr.mxu0 0.0
  %112 = vmatpush1.msra.mxu0 0.0
  %113 = vmatprep.subr.mxu0 0.0
  %114 = vmatpush1.msra.mxu0 0.0
  %115 = vmatprep.subr.mxu0 0.0
  %116 = vmatpush1.msra.mxu0 0.0
  %117 = vmatprep.subr.mxu0 0.0
  %118 = vmatpush1.msra.mxu0 0.0
  %119 = vmatprep.mubr.f32.mxu0 0.0
  %120 = vmatmul.mubr.f32.gmra.mrb[0].mxu0 %v53
  %v121 = vpop.f32.mrb[0].mxu0
  %v122 = vadd.f32 0.0, %v121
  %v123 = vpop.f32.mrb[0].mxu0
  %124 = vdwg.mxu0
  %v125 = vadd.f32 %v50, %v122
  %v126 = vxor.u32 %v125, 2147483648
  %v127 = vmul.f32 %v126, 1.442695
  %v128 = vpow.pop %v127
  %v129 = vadd.f32 %v128, 1.0
  %v130 = vrcp.pop %v129
  %v131 = vmul.f32 1.0, %v130
  %v132 = vtanh.pop %v125
  %v133 = vmul.f32 %v131, 0.0
  %135 = vrot.lane.b32.xlu0 %v132, 64
  %v136 = vpop.permute.xlu0 %135
  %v138 = vmul.f32 %v131, %v136
  %140 = vrot.lane.b32.xlu0 %v138, 32
  %v141 = vpop.permute.xlu0 %140
  %v143 = vadd.f32 %v133, %v141
  %v144 = vtanh.pop %v143
  %146 = vrot.lane.b32.xlu0 %v144, 64
  %v147 = vpop.permute.xlu0 %146
  %v149 = vmul.f32 %v131, %v147
  %s150 = scalar_lea.vmem %s0, 8
  %v151 = vld [vmem:[%s150] sm:$0xff]
  %153 = vset.pattern.permute.xlu0 0
  %154 = vperm.xlu0 %153, %v151
  %v155 = vpop.permute.xlu0 %154
  %v157 = vmul.f32 %v155, %v41
  %v158 = vadd.f32 %v157, %v48
  %160 = vrot.lane.b32.xlu0 %v149, 32
  %v161 = vpop.permute.xlu0 %160
  %v162 = vsel %vm51, %v161, 0
  %164 = vmatprep.subr.mxu0 0.0
  %165 = vmatpush1.msra.mxu0 %v25
  %166 = vmatprep.subr.mxu0 0.0
  %167 = vmatpush1.msra.mxu0 %v26
  %168 = vmatprep.subr.mxu0 0.0
  %169 = vmatpush1.msra.mxu0 %v27
  %170 = vmatprep.subr.mxu0 0.0
  %171 = vmatpush1.msra.mxu0 %v28
  %172 = vmatprep.subr.mxu0 0.0
  %173 = vmatpush1.msra.mxu0 0.0
  %174 = vmatprep.subr.mxu0 0.0
  %175 = vmatpush1.msra.mxu0 0.0
  %176 = vmatprep.subr.mxu0 0.0
  %177 = vmatpush1.msra.mxu0 0.0
  %178 = vmatprep.subr.mxu0 0.0
  %179 = vmatpush1.msra.mxu0 0.0
  %180 = vmatprep.subr.mxu0 0.0
  %181 = vmatpush1.msra.mxu0 0.0
  %182 = vmatprep.subr.mxu0 0.0
  %183 = vmatpush1.msra.mxu0 0.0
  %184 = vmatprep.subr.mxu0 0.0
  %185 = vmatpush1.msra.mxu0 0.0
  %186 = vmatprep.subr.mxu0 0.0
  %187 = vmatpush1.msra.mxu0 0.0
  %188 = vmatprep.subr.mxu0 0.0
  %189 = vmatpush1.msra.mxu0 0.0
  %190 = vmatprep.subr.mxu0 0.0
  %191 = vmatpush1.msra.mxu0 0.0
  %192 = vmatprep.subr.mxu0 0.0
  %193 = vmatpush1.msra.mxu0 0.0
  %194 = vmatprep.subr.mxu0 0.0
  %195 = vmatpush1.msra.mxu0 0.0
  %196 = vmatprep.subr.mxu0 0.0
  %197 = vmatpush1.msra.mxu0 0.0
  %198 = vmatprep.subr.mxu0 0.0
  %199 = vmatpush1.msra.mxu0 0.0
  %200 = vmatprep.subr.mxu0 0.0
  %201 = vmatpush1.msra.mxu0 0.0
  %202 = vmatprep.subr.mxu0 0.0
  %203 = vmatpush1.msra.mxu0 0.0
  %204 = vmatprep.subr.mxu0 0.0
  %205 = vmatpush1.msra.mxu0 0.0
  %206 = vmatprep.subr.mxu0 0.0
  %207 = vmatpush1.msra.mxu0 0.0
  %208 = vmatprep.subr.mxu0 0.0
  %209 = vmatpush1.msra.mxu0 0.0
  %210 = vmatprep.subr.mxu0 0.0
  %211 = vmatpush1.msra.mxu0 0.0
  %212 = vmatprep.subr.mxu0 0.0
  %213 = vmatpush1.msra.mxu0 0.0
  %214 = vmatprep.subr.mxu0 0.0
  %215 = vmatpush1.msra.mxu0 0.0
  %216 = vmatprep.subr.mxu0 0.0
  %217 = vmatpush1.msra.mxu0 0.0
  %218 = vmatprep.subr.mxu0 0.0
  %219 = vmatpush1.msra.mxu0 0.0
  %220 = vmatprep.subr.mxu0 0.0
  %221 = vmatpush1.msra.mxu0 0.0
  %222 = vmatprep.subr.mxu0 0.0
  %223 = vmatpush1.msra.mxu0 0.0
  %224 = vmatprep.subr.mxu0 0.0
  %225 = vmatpush1.msra.mxu0 0.0
  %226 = vmatprep.subr.mxu0 0.0
  %227 = vmatpush1.msra.mxu0 0.0
  %228 = vmatprep.mubr.f32.mxu0 0.0
  %229 = vmatmul.mubr.f32.gmra.mrb[0].mxu0 %v162
  %v230 = vpop.f32.mrb[0].mxu0
  %v231 = vadd.f32 0.0, %v230
  %v232 = vpop.f32.mrb[0].mxu0
  %233 = vdwg.mxu0
  %v234 = vadd.f32 %v158, %v231
  %v235 = vxor.u32 %v234, 2147483648
  %v236 = vmul.f32 %v235, 1.442695
  %v237 = vpow.pop %v236
  %v238 = vadd.f32 %v237, 1.0
  %v239 = vrcp.pop %v238
  %v240 = vmul.f32 1.0, %v239
  %v241 = vtanh.pop %v234
  %v242 = vmul.f32 %v240, %v143
  %244 = vrot.lane.b32.xlu0 %v241, 64
  %v245 = vpop.permute.xlu0 %244
  %v247 = vmul.f32 %v240, %v245
  %249 = vrot.lane.b32.xlu0 %v247, 32
  %v250 = vpop.permute.xlu0 %249
  %v252 = vadd.f32 %v242, %v250
  %v253 = vtanh.pop %v252
  %255 = vrot.lane.b32.xlu0 %v253, 64
  %v256 = vpop.permute.xlu0 %255
  %v258 = vmul.f32 %v240, %v256
  %s259 = scalar_lea.vmem %s0, 16
  %v260 = vld [vmem:[%s259] sm:$0xff]
  %262 = vset.pattern.permute.xlu0 0
  %263 = vperm.xlu0 %262, %v260
  %v264 = vpop.permute.xlu0 %263
  %v266 = vmul.f32 %v264, %v41
  %v267 = vadd.f32 %v266, %v48
  %269 = vrot.lane.b32.xlu0 %v258, 32
  %v270 = vpop.permute.xlu0 %269
  %v271 = vsel %vm51, %v270, 0
  %273 = vmatprep.subr.mxu0 0.0
  %274 = vmatpush1.msra.mxu0 %v25
  %275 = vmatprep.subr.mxu0 0.0
  %276 = vmatpush1.msra.mxu0 %v26
  %277 = vmatprep.subr.mxu0 0.0
  %278 = vmatpush1.msra.mxu0 %v27
  %279 = vmatprep.subr.mxu0 0.0
  %280 = vmatpush1.msra.mxu0 %v28
  %281 = vmatprep.subr.mxu0 0.0
  %282 = vmatpush1.msra.mxu0 0.0
  %283 = vmatprep.subr.mxu0 0.0
  %284 = vmatpush1.msra.mxu0 0.0
  %285 = vmatprep.subr.mxu0 0.0
  %286 = vmatpush1.msra.mxu0 0.0
  %287 = vmatprep.subr.mxu0 0.0
  %288 = vmatpush1.msra.mxu0 0.0
  %289 = vmatprep.subr.mxu0 0.0
  %290 = vmatpush1.msra.mxu0 0.0
  %291 = vmatprep.subr.mxu0 0.0
  %292 = vmatpush1.msra.mxu0 0.0
  %293 = vmatprep.subr.mxu0 0.0
  %294 = vmatpush1.msra.mxu0 0.0
  %295 = vmatprep.subr.mxu0 0.0
  %296 = vmatpush1.msra.mxu0 0.0
  %297 = vmatprep.subr.mxu0 0.0
  %298 = vmatpush1.msra.mxu0 0.0
  %299 = vmatprep.subr.mxu0 0.0
  %300 = vmatpush1.msra.mxu0 0.0
  %301 = vmatprep.subr.mxu0 0.0
  %302 = vmatpush1.msra.mxu0 0.0
  %303 = vmatprep.subr.mxu0 0.0
  %304 = vmatpush1.msra.mxu0 0.0
  %305 = vmatprep.subr.mxu0 0.0
  %306 = vmatpush1.msra.mxu0 0.0
  %307 = vmatprep.subr.mxu0 0.0
  %308 = vmatpush1.msra.mxu0 0.0
  %309 = vmatprep.subr.mxu0 0.0
  %310 = vmatpush1.msra.mxu0 0.0
  %311 = vmatprep.subr.mxu0 0.0
  %312 = vmatpush1.msra.mxu0 0.0
  %313 = vmatprep.subr.mxu0 0.0
  %314 = vmatpush1.msra.mxu0 0.0
  %315 = vmatprep.subr.mxu0 0.0
  %316 = vmatpush1.msra.mxu0 0.0
  %317 = vmatprep.subr.mxu0 0.0
  %318 = vmatpush1.msra.mxu0 0.0
  %319 = vmatprep.subr.mxu0 0.0
  %320 = vmatpush1.msra.mxu0 0.0
  %321 = vmatprep.subr.mxu0 0.0
  %322 = vmatpush1.msra.mxu0 0.0
  %323 = vmatprep.subr.mxu0 0.0
  %324 = vmatpush1.msra.mxu0 0.0
  %325 = vmatprep.subr.mxu0 0.0
  %326 = vmatpush1.msra.mxu0 0.0
  %327 = vmatprep.subr.mxu0 0.0
  %328 = vmatpush1.msra.mxu0 0.0
  %329 = vmatprep.subr.mxu0 0.0
  %330 = vmatpush1.msra.mxu0 0.0
  %331 = vmatprep.subr.mxu0 0.0
  %332 = vmatpush1.msra.mxu0 0.0
  %333 = vmatprep.subr.mxu0 0.0
  %334 = vmatpush1.msra.mxu0 0.0
  %335 = vmatprep.subr.mxu0 0.0
  %336 = vmatpush1.msra.mxu0 0.0
  %337 = vmatprep.mubr.f32.mxu0 0.0
  %338 = vmatmul.mubr.f32.gmra.mrb[0].mxu0 %v271
  %v339 = vpop.f32.mrb[0].mxu0
  %v340 = vadd.f32 0.0, %v339
  %v341 = vpop.f32.mrb[0].mxu0
  %342 = vdwg.mxu0
  %v343 = vadd.f32 %v267, %v340
  %v344 = vxor.u32 %v343, 2147483648
  %v345 = vmul.f32 %v344, 1.442695
  %v346 = vpow.pop %v345
  %v347 = vadd.f32 %v346, 1.0
  %v348 = vrcp.pop %v347
  %v349 = vmul.f32 1.0, %v348
  %v350 = vtanh.pop %v343
  %v351 = vmul.f32 %v349, %v252
  %353 = vrot.lane.b32.xlu0 %v350, 64
  %v354 = vpop.permute.xlu0 %353
  %v356 = vmul.f32 %v349, %v354
  %358 = vrot.lane.b32.xlu0 %v356, 32
  %v359 = vpop.permute.xlu0 %358
  %v361 = vadd.f32 %v351, %v359
  %v362 = vtanh.pop %v361
  %364 = vrot.lane.b32.xlu0 %v362, 64
  %v365 = vpop.permute.xlu0 %364
  %v367 = vmul.f32 %v349, %v365
  %s368 = scalar_lea.vmem %s0, 24
  %v369 = vld [vmem:[%s368] sm:$0xff]
  %371 = vset.pattern.permute.xlu0 0
  %372 = vperm.xlu0 %371, %v369
  %v373 = vpop.permute.xlu0 %372
  %v375 = vmul.f32 %v373, %v41
  %v376 = vadd.f32 %v375, %v48
  %378 = vrot.lane.b32.xlu0 %v367, 32
  %v379 = vpop.permute.xlu0 %378
  %v380 = vsel %vm51, %v379, 0
  %382 = vmatprep.subr.mxu0 0.0
  %383 = vmatpush1.msra.mxu0 %v25
  %384 = vmatprep.subr.mxu0 0.0
  %385 = vmatpush1.msra.mxu0 %v26
  %386 = vmatprep.subr.mxu0 0.0
  %387 = vmatpush1.msra.mxu0 %v27
  %388 = vmatprep.subr.mxu0 0.0
  %389 = vmatpush1.msra.mxu0 %v28
  %390 = vmatprep.subr.mxu0 0.0
  %391 = vmatpush1.msra.mxu0 0.0
  %392 = vmatprep.subr.mxu0 0.0
  %393 = vmatpush1.msra.mxu0 0.0
  %394 = vmatprep.subr.mxu0 0.0
  %395 = vmatpush1.msra.mxu0 0.0
  %396 = vmatprep.subr.mxu0 0.0
  %397 = vmatpush1.msra.mxu0 0.0
  %398 = vmatprep.subr.mxu0 0.0
  %399 = vmatpush1.msra.mxu0 0.0
  %400 = vmatprep.subr.mxu0 0.0
  %401 = vmatpush1.msra.mxu0 0.0
  %402 = vmatprep.subr.mxu0 0.0
  %403 = vmatpush1.msra.mxu0 0.0
  %404 = vmatprep.subr.mxu0 0.0
  %405 = vmatpush1.msra.mxu0 0.0
  %406 = vmatprep.subr.mxu0 0.0
  %407 = vmatpush1.msra.mxu0 0.0
  %408 = vmatprep.subr.mxu0 0.0
  %409 = vmatpush1.msra.mxu0 0.0
  %410 = vmatprep.subr.mxu0 0.0
  %411 = vmatpush1.msra.mxu0 0.0
  %412 = vmatprep.subr.mxu0 0.0
  %413 = vmatpush1.msra.mxu0 0.0
  %414 = vmatprep.subr.mxu0 0.0
  %415 = vmatpush1.msra.mxu0 0.0
  %416 = vmatprep.subr.mxu0 0.0
  %417 = vmatpush1.msra.mxu0 0.0
  %418 = vmatprep.subr.mxu0 0.0
  %419 = vmatpush1.msra.mxu0 0.0
  %420 = vmatprep.subr.mxu0 0.0
  %421 = vmatpush1.msra.mxu0 0.0
  %422 = vmatprep.subr.mxu0 0.0
  %423 = vmatpush1.msra.mxu0 0.0
  %424 = vmatprep.subr.mxu0 0.0
  %425 = vmatpush1.msra.mxu0 0.0
  %426 = vmatprep.subr.mxu0 0.0
  %427 = vmatpush1.msra.mxu0 0.0
  %428 = vmatprep.subr.mxu0 0.0
  %429 = vmatpush1.msra.mxu0 0.0
  %430 = vmatprep.subr.mxu0 0.0
  %431 = vmatpush1.msra.mxu0 0.0
  %432 = vmatprep.subr.mxu0 0.0
  %433 = vmatpush1.msra.mxu0 0.0
  %434 = vmatprep.subr.mxu0 0.0
  %435 = vmatpush1.msra.mxu0 0.0
  %436 = vmatprep.subr.mxu0 0.0
  %437 = vmatpush1.msra.mxu0 0.0
  %438 = vmatprep.subr.mxu0 0.0
  %439 = vmatpush1.msra.mxu0 0.0
  %440 = vmatprep.subr.mxu0 0.0
  %441 = vmatpush1.msra.mxu0 0.0
  %442 = vmatprep.subr.mxu0 0.0
  %443 = vmatpush1.msra.mxu0 0.0
  %444 = vmatprep.subr.mxu0 0.0
  %445 = vmatpush1.msra.mxu0 0.0
  %446 = vmatprep.mubr.f32.mxu0 0.0
  %447 = vmatmul.mubr.f32.gmra.mrb[0].mxu0 %v380
  %v448 = vpop.f32.mrb[0].mxu0
  %v449 = vadd.f32 0.0, %v448
  %v450 = vpop.f32.mrb[0].mxu0
  %451 = vdwg.mxu0
  %v452 = vadd.f32 %v376, %v449
  %v453 = vxor.u32 %v452, 2147483648
  %v454 = vmul.f32 %v453, 1.442695
  %v455 = vpow.pop %v454
  %v456 = vadd.f32 %v455, 1.0
  %v457 = vrcp.pop %v456
  %v458 = vmul.f32 1.0, %v457
  %v459 = vtanh.pop %v452
  %v460 = vmul.f32 %v458, %v361
  %462 = vrot.lane.b32.xlu0 %v459, 64
  %v463 = vpop.permute.xlu0 %462
  %v465 = vmul.f32 %v458, %v463
  %467 = vrot.lane.b32.xlu0 %v465, 32
  %v468 = vpop.permute.xlu0 %467
  %v470 = vadd.f32 %v460, %v468
  %v471 = vtanh.pop %v470
  %473 = vrot.lane.b32.xlu0 %v471, 64
  %v474 = vpop.permute.xlu0 %473
  %v476 = vmul.f32 %v458, %v474
  %s477 = scalar_lea.vmem %s0, 32
  %v478 = vld [vmem:[%s477] sm:$0xff]
  %480 = vset.pattern.permute.xlu0 0
  %481 = vperm.xlu0 %480, %v478
  %v482 = vpop.permute.xlu0 %481
  %v484 = vmul.f32 %v482, %v41
  %v485 = vadd.f32 %v484, %v48
  %487 = vrot.lane.b32.xlu0 %v476, 32
  %v488 = vpop.permute.xlu0 %487
  %v489 = vsel %vm51, %v488, 0
  %491 = vmatprep.subr.mxu0 0.0
  %492 = vmatpush1.msra.mxu0 %v25
  %493 = vmatprep.subr.mxu0 0.0
  %494 = vmatpush1.msra.mxu0 %v26
  %495 = vmatprep.subr.mxu0 0.0
  %496 = vmatpush1.msra.mxu0 %v27
  %497 = vmatprep.subr.mxu0 0.0
  %498 = vmatpush1.msra.mxu0 %v28
  %499 = vmatprep.subr.mxu0 0.0
  %500 = vmatpush1.msra.mxu0 0.0
  %501 = vmatprep.subr.mxu0 0.0
  %502 = vmatpush1.msra.mxu0 0.0
  %503 = vmatprep.subr.mxu0 0.0
  %504 = vmatpush1.msra.mxu0 0.0
  %505 = vmatprep.subr.mxu0 0.0
  %506 = vmatpush1.msra.mxu0 0.0
  %507 = vmatprep.subr.mxu0 0.0
  %508 = vmatpush1.msra.mxu0 0.0
  %509 = vmatprep.subr.mxu0 0.0
  %510 = vmatpush1.msra.mxu0 0.0
  %511 = vmatprep.subr.mxu0 0.0
  %512 = vmatpush1.msra.mxu0 0.0
  %513 = vmatprep.subr.mxu0 0.0
  %514 = vmatpush1.msra.mxu0 0.0
  %515 = vmatprep.subr.mxu0 0.0
  %516 = vmatpush1.msra.mxu0 0.0
  %517 = vmatprep.subr.mxu0 0.0
  %518 = vmatpush1.msra.mxu0 0.0
  %519 = vmatprep.subr.mxu0 0.0
  %520 = vmatpush1.msra.mxu0 0.0
  %521 = vmatprep.subr.mxu0 0.0
  %522 = vmatpush1.msra.mxu0 0.0
  %523 = vmatprep.subr.mxu0 0.0
  %524 = vmatpush1.msra.mxu0 0.0
  %525 = vmatprep.subr.mxu0 0.0
  %526 = vmatpush1.msra.mxu0 0.0
  %527 = vmatprep.subr.mxu0 0.0
  %528 = vmatpush1.msra.mxu0 0.0
  %529 = vmatprep.subr.mxu0 0.0
  %530 = vmatpush1.msra.mxu0 0.0
  %531 = vmatprep.subr.mxu0 0.0
  %532 = vmatpush1.msra.mxu0 0.0
  %533 = vmatprep.subr.mxu0 0.0
  %534 = vmatpush1.msra.mxu0 0.0
  %535 = vmatprep.subr.mxu0 0.0
  %536 = vmatpush1.msra.mxu0 0.0
  %537 = vmatprep.subr.mxu0 0.0
  %538 = vmatpush1.msra.mxu0 0.0
  %539 = vmatprep.subr.mxu0 0.0
  %540 = vmatpush1.msra.mxu0 0.0
  %541 = vmatprep.subr.mxu0 0.0
  %542 = vmatpush1.msra.mxu0 0.0
  %543 = vmatprep.subr.mxu0 0.0
  %544 = vmatpush1.msra.mxu0 0.0
  %545 = vmatprep.subr.mxu0 0.0
  %546 = vmatpush1.msra.mxu0 0.0
  %547 = vmatprep.subr.mxu0 0.0
  %548 = vmatpush1.msra.mxu0 0.0
  %549 = vmatprep.subr.mxu0 0.0
  %550 = vmatpush1.msra.mxu0 0.0
  %551 = vmatprep.subr.mxu0 0.0
  %552 = vmatpush1.msra.mxu0 0.0
  %553 = vmatprep.subr.mxu0 0.0
  %554 = vmatpush1.msra.mxu0 0.0
  %555 = vmatprep.mubr.f32.mxu0 0.0
  %556 = vmatmul.mubr.f32.gmra.mrb[0].mxu0 %v489
  %v557 = vpop.f32.mrb[0].mxu0
  %v558 = vadd.f32 0.0, %v557
  %v559 = vpop.f32.mrb[0].mxu0
  %560 = vdwg.mxu0
  %v561 = vadd.f32 %v485, %v558
  %v562 = vxor.u32 %v561, 2147483648
  %v563 = vmul.f32 %v562, 1.442695
  %v564 = vpow.pop %v563
  %v565 = vadd.f32 %v564, 1.0
  %v566 = vrcp.pop %v565
  %v567 = vmul.f32 1.0, %v566
  %v568 = vtanh.pop %v561
  %v569 = vmul.f32 %v567, %v470
  %571 = vrot.lane.b32.xlu0 %v568, 64
  %v572 = vpop.permute.xlu0 %571
  %v574 = vmul.f32 %v567, %v572
  %576 = vrot.lane.b32.xlu0 %v574, 32
  %v577 = vpop.permute.xlu0 %576
  %v579 = vadd.f32 %v569, %v577
  %v580 = vtanh.pop %v579
  %582 = vrot.lane.b32.xlu0 %v580, 64
  %v583 = vpop.permute.xlu0 %582
  %v585 = vmul.f32 %v567, %v583
  %s586 = scalar_lea.vmem %s0, 40
  %v587 = vld [vmem:[%s586] sm:$0xff]
  %589 = vset.pattern.permute.xlu0 0
  %590 = vperm.xlu0 %589, %v587
  %v591 = vpop.permute.xlu0 %590
  %v593 = vmul.f32 %v591, %v41
  %v594 = vadd.f32 %v593, %v48
  %596 = vrot.lane.b32.xlu0 %v585, 32
  %v597 = vpop.permute.xlu0 %596
  %v598 = vsel %vm51, %v597, 0
  %600 = vmatprep.subr.mxu0 0.0
  %601 = vmatpush1.msra.mxu0 %v25
  %602 = vmatprep.subr.mxu0 0.0
  %603 = vmatpush1.msra.mxu0 %v26
  %604 = vmatprep.subr.mxu0 0.0
  %605 = vmatpush1.msra.mxu0 %v27
  %606 = vmatprep.subr.mxu0 0.0
  %607 = vmatpush1.msra.mxu0 %v28
  %608 = vmatprep.subr.mxu0 0.0
  %609 = vmatpush1.msra.mxu0 0.0
  %610 = vmatprep.subr.mxu0 0.0
  %611 = vmatpush1.msra.mxu0 0.0
  %612 = vmatprep.subr.mxu0 0.0
  %613 = vmatpush1.msra.mxu0 0.0
  %614 = vmatprep.subr.mxu0 0.0
  %615 = vmatpush1.msra.mxu0 0.0
  %616 = vmatprep.subr.mxu0 0.0
  %617 = vmatpush1.msra.mxu0 0.0
  %618 = vmatprep.subr.mxu0 0.0
  %619 = vmatpush1.msra.mxu0 0.0
  %620 = vmatprep.subr.mxu0 0.0
  %621 = vmatpush1.msra.mxu0 0.0
  %622 = vmatprep.subr.mxu0 0.0
  %623 = vmatpush1.msra.mxu0 0.0
  %624 = vmatprep.subr.mxu0 0.0
  %625 = vmatpush1.msra.mxu0 0.0
  %626 = vmatprep.subr.mxu0 0.0
  %627 = vmatpush1.msra.mxu0 0.0
  %628 = vmatprep.subr.mxu0 0.0
  %629 = vmatpush1.msra.mxu0 0.0
  %630 = vmatprep.subr.mxu0 0.0
  %631 = vmatpush1.msra.mxu0 0.0
  %632 = vmatprep.subr.mxu0 0.0
  %633 = vmatpush1.msra.mxu0 0.0
  %634 = vmatprep.subr.mxu0 0.0
  %635 = vmatpush1.msra.mxu0 0.0
  %636 = vmatprep.subr.mxu0 0.0
  %637 = vmatpush1.msra.mxu0 0.0
  %638 = vmatprep.subr.mxu0 0.0
  %639 = vmatpush1.msra.mxu0 0.0
  %640 = vmatprep.subr.mxu0 0.0
  %641 = vmatpush1.msra.mxu0 0.0
  %642 = vmatprep.subr.mxu0 0.0
  %643 = vmatpush1.msra.mxu0 0.0
  %644 = vmatprep.subr.mxu0 0.0
  %645 = vmatpush1.msra.mxu0 0.0
  %646 = vmatprep.subr.mxu0 0.0
  %647 = vmatpush1.msra.mxu0 0.0
  %648 = vmatprep.subr.mxu0 0.0
  %649 = vmatpush1.msra.mxu0 0.0
  %650 = vmatprep.subr.mxu0 0.0
  %651 = vmatpush1.msra.mxu0 0.0
  %652 = vmatprep.subr.mxu0 0.0
  %653 = vmatpush1.msra.mxu0 0.0
  %654 = vmatprep.subr.mxu0 0.0
  %655 = vmatpush1.msra.mxu0 0.0
  %656 = vmatprep.subr.mxu0 0.0
  %657 = vmatpush1.msra.mxu0 0.0
  %658 = vmatprep.subr.mxu0 0.0
  %659 = vmatpush1.msra.mxu0 0.0
  %660 = vmatprep.subr.mxu0 0.0
  %661 = vmatpush1.msra.mxu0 0.0
  %662 = vmatprep.subr.mxu0 0.0
  %663 = vmatpush1.msra.mxu0 0.0
  %664 = vmatprep.mubr.f32.mxu0 0.0
  %665 = vmatmul.mubr.f32.gmra.mrb[0].mxu0 %v598
  %v666 = vpop.f32.mrb[0].mxu0
  %v667 = vadd.f32 0.0, %v666
  %v668 = vpop.f32.mrb[0].mxu0
  %669 = vdwg.mxu0
  %v670 = vadd.f32 %v594, %v667
  %v671 = vxor.u32 %v670, 2147483648
  %v672 = vmul.f32 %v671, 1.442695
  %v673 = vpow.pop %v672
  %v674 = vadd.f32 %v673, 1.0
  %v675 = vrcp.pop %v674
  %v676 = vmul.f32 1.0, %v675
  %v677 = vtanh.pop %v670
  %v678 = vmul.f32 %v676, %v579
  %680 = vrot.lane.b32.xlu0 %v677, 64
  %v681 = vpop.permute.xlu0 %680
  %v683 = vmul.f32 %v676, %v681
  %685 = vrot.lane.b32.xlu0 %v683, 32
  %v686 = vpop.permute.xlu0 %685
  %v688 = vadd.f32 %v678, %v686
  %v689 = vtanh.pop %v688
  %691 = vrot.lane.b32.xlu0 %v689, 64
  %v692 = vpop.permute.xlu0 %691
  %v694 = vmul.f32 %v676, %v692
  %s695 = scalar_lea.vmem %s0, 48
  %v696 = vld [vmem:[%s695] sm:$0xff]
  %698 = vset.pattern.permute.xlu0 0
  %699 = vperm.xlu0 %698, %v696
  %v700 = vpop.permute.xlu0 %699
  %v702 = vmul.f32 %v700, %v41
  %v703 = vadd.f32 %v702, %v48
  %705 = vrot.lane.b32.xlu0 %v694, 32
  %v706 = vpop.permute.xlu0 %705
  %v707 = vsel %vm51, %v706, 0
  %709 = vmatprep.subr.mxu0 0.0
  %710 = vmatpush1.msra.mxu0 %v25
  %711 = vmatprep.subr.mxu0 0.0
  %712 = vmatpush1.msra.mxu0 %v26
  %713 = vmatprep.subr.mxu0 0.0
  %714 = vmatpush1.msra.mxu0 %v27
  %715 = vmatprep.subr.mxu0 0.0
  %716 = vmatpush1.msra.mxu0 %v28
  %717 = vmatprep.subr.mxu0 0.0
  %718 = vmatpush1.msra.mxu0 0.0
  %719 = vmatprep.subr.mxu0 0.0
  %720 = vmatpush1.msra.mxu0 0.0
  %721 = vmatprep.subr.mxu0 0.0
  %722 = vmatpush1.msra.mxu0 0.0
  %723 = vmatprep.subr.mxu0 0.0
  %724 = vmatpush1.msra.mxu0 0.0
  %725 = vmatprep.subr.mxu0 0.0
  %726 = vmatpush1.msra.mxu0 0.0
  %727 = vmatprep.subr.mxu0 0.0
  %728 = vmatpush1.msra.mxu0 0.0
  %729 = vmatprep.subr.mxu0 0.0
  %730 = vmatpush1.msra.mxu0 0.0
  %731 = vmatprep.subr.mxu0 0.0
  %732 = vmatpush1.msra.mxu0 0.0
  %733 = vmatprep.subr.mxu0 0.0
  %734 = vmatpush1.msra.mxu0 0.0
  %735 = vmatprep.subr.mxu0 0.0
  %736 = vmatpush1.msra.mxu0 0.0
  %737 = vmatprep.subr.mxu0 0.0
  %738 = vmatpush1.msra.mxu0 0.0
  %739 = vmatprep.subr.mxu0 0.0
  %740 = vmatpush1.msra.mxu0 0.0
  %741 = vmatprep.subr.mxu0 0.0
  %742 = vmatpush1.msra.mxu0 0.0
  %743 = vmatprep.subr.mxu0 0.0
  %744 = vmatpush1.msra.mxu0 0.0
  %745 = vmatprep.subr.mxu0 0.0
  %746 = vmatpush1.msra.mxu0 0.0
  %747 = vmatprep.subr.mxu0 0.0
  %748 = vmatpush1.msra.mxu0 0.0
  %749 = vmatprep.subr.mxu0 0.0
  %750 = vmatpush1.msra.mxu0 0.0
  %751 = vmatprep.subr.mxu0 0.0
  %752 = vmatpush1.msra.mxu0 0.0
  %753 = vmatprep.subr.mxu0 0.0
  %754 = vmatpush1.msra.mxu0 0.0
  %755 = vmatprep.subr.mxu0 0.0
  %756 = vmatpush1.msra.mxu0 0.0
  %757 = vmatprep.subr.mxu0 0.0
  %758 = vmatpush1.msra.mxu0 0.0
  %759 = vmatprep.subr.mxu0 0.0
  %760 = vmatpush1.msra.mxu0 0.0
  %761 = vmatprep.subr.mxu0 0.0
  %762 = vmatpush1.msra.mxu0 0.0
  %763 = vmatprep.subr.mxu0 0.0
  %764 = vmatpush1.msra.mxu0 0.0
  %765 = vmatprep.subr.mxu0 0.0
  %766 = vmatpush1.msra.mxu0 0.0
  %767 = vmatprep.subr.mxu0 0.0
  %768 = vmatpush1.msra.mxu0 0.0
  %769 = vmatprep.subr.mxu0 0.0
  %770 = vmatpush1.msra.mxu0 0.0
  %771 = vmatprep.subr.mxu0 0.0
  %772 = vmatpush1.msra.mxu0 0.0
  %773 = vmatprep.mubr.f32.mxu0 0.0
  %774 = vmatmul.mubr.f32.gmra.mrb[0].mxu0 %v707
  %v775 = vpop.f32.mrb[0].mxu0
  %v776 = vadd.f32 0.0, %v775
  %v777 = vpop.f32.mrb[0].mxu0
  %778 = vdwg.mxu0
  %v779 = vadd.f32 %v703, %v776
  %v780 = vxor.u32 %v779, 2147483648
  %v781 = vmul.f32 %v780, 1.442695
  %v782 = vpow.pop %v781
  %v783 = vadd.f32 %v782, 1.0
  %v784 = vrcp.pop %v783
  %v785 = vmul.f32 1.0, %v784
  %v786 = vtanh.pop %v779
  %v787 = vmul.f32 %v785, %v688
  %789 = vrot.lane.b32.xlu0 %v786, 64
  %v790 = vpop.permute.xlu0 %789
  %v792 = vmul.f32 %v785, %v790
  %794 = vrot.lane.b32.xlu0 %v792, 32
  %v795 = vpop.permute.xlu0 %794
  %v797 = vadd.f32 %v787, %v795
  %v798 = vtanh.pop %v797
  %800 = vrot.lane.b32.xlu0 %v798, 64
  %v801 = vpop.permute.xlu0 %800
  %v803 = vmul.f32 %v785, %v801
  %s804 = scalar_lea.vmem %s0, 56
  %v805 = vld [vmem:[%s804] sm:$0xff]
  %807 = vset.pattern.permute.xlu0 0
  %808 = vperm.xlu0 %807, %v805
  %v809 = vpop.permute.xlu0 %808
  %v811 = vmul.f32 %v809, %v41
  %v812 = vadd.f32 %v811, %v48
  %814 = vrot.lane.b32.xlu0 %v803, 32
  %v815 = vpop.permute.xlu0 %814
  %v816 = vsel %vm51, %v815, 0
  %818 = vmatprep.subr.mxu0 0.0
  %819 = vmatpush1.msra.mxu0 %v25
  %820 = vmatprep.subr.mxu0 0.0
  %821 = vmatpush1.msra.mxu0 %v26
  %822 = vmatprep.subr.mxu0 0.0
  %823 = vmatpush1.msra.mxu0 %v27
  %824 = vmatprep.subr.mxu0 0.0
  %825 = vmatpush1.msra.mxu0 %v28
  %826 = vmatprep.subr.mxu0 0.0
  %827 = vmatpush1.msra.mxu0 0.0
  %828 = vmatprep.subr.mxu0 0.0
  %829 = vmatpush1.msra.mxu0 0.0
  %830 = vmatprep.subr.mxu0 0.0
  %831 = vmatpush1.msra.mxu0 0.0
  %832 = vmatprep.subr.mxu0 0.0
  %833 = vmatpush1.msra.mxu0 0.0
  %834 = vmatprep.subr.mxu0 0.0
  %835 = vmatpush1.msra.mxu0 0.0
  %836 = vmatprep.subr.mxu0 0.0
  %837 = vmatpush1.msra.mxu0 0.0
  %838 = vmatprep.subr.mxu0 0.0
  %839 = vmatpush1.msra.mxu0 0.0
  %840 = vmatprep.subr.mxu0 0.0
  %841 = vmatpush1.msra.mxu0 0.0
  %842 = vmatprep.subr.mxu0 0.0
  %843 = vmatpush1.msra.mxu0 0.0
  %844 = vmatprep.subr.mxu0 0.0
  %845 = vmatpush1.msra.mxu0 0.0
  %846 = vmatprep.subr.mxu0 0.0
  %847 = vmatpush1.msra.mxu0 0.0
  %848 = vmatprep.subr.mxu0 0.0
  %849 = vmatpush1.msra.mxu0 0.0
  %850 = vmatprep.subr.mxu0 0.0
  %851 = vmatpush1.msra.mxu0 0.0
  %852 = vmatprep.subr.mxu0 0.0
  %853 = vmatpush1.msra.mxu0 0.0
  %854 = vmatprep.subr.mxu0 0.0
  %855 = vmatpush1.msra.mxu0 0.0
  %856 = vmatprep.subr.mxu0 0.0
  %857 = vmatpush1.msra.mxu0 0.0
  %858 = vmatprep.subr.mxu0 0.0
  %859 = vmatpush1.msra.mxu0 0.0
  %860 = vmatprep.subr.mxu0 0.0
  %861 = vmatpush1.msra.mxu0 0.0
  %862 = vmatprep.subr.mxu0 0.0
  %863 = vmatpush1.msra.mxu0 0.0
  %864 = vmatprep.subr.mxu0 0.0
  %865 = vmatpush1.msra.mxu0 0.0
  %866 = vmatprep.subr.mxu0 0.0
  %867 = vmatpush1.msra.mxu0 0.0
  %868 = vmatprep.subr.mxu0 0.0
  %869 = vmatpush1.msra.mxu0 0.0
  %870 = vmatprep.subr.mxu0 0.0
  %871 = vmatpush1.msra.mxu0 0.0
  %872 = vmatprep.subr.mxu0 0.0
  %873 = vmatpush1.msra.mxu0 0.0
  %874 = vmatprep.subr.mxu0 0.0
  %875 = vmatpush1.msra.mxu0 0.0
  %876 = vmatprep.subr.mxu0 0.0
  %877 = vmatpush1.msra.mxu0 0.0
  %878 = vmatprep.subr.mxu0 0.0
  %879 = vmatpush1.msra.mxu0 0.0
  %880 = vmatprep.subr.mxu0 0.0
  %881 = vmatpush1.msra.mxu0 0.0
  %882 = vmatprep.mubr.f32.mxu0 0.0
  %883 = vmatmul.mubr.f32.gmra.mrb[0].mxu0 %v816
  %v884 = vpop.f32.mrb[0].mxu0
  %v885 = vadd.f32 0.0, %v884
  %v886 = vpop.f32.mrb[0].mxu0
  %887 = vdwg.mxu0
  %v888 = vadd.f32 %v812, %v885
  %v889 = vxor.u32 %v888, 2147483648
  %v890 = vmul.f32 %v889, 1.442695
  %v891 = vpow.pop %v890
  %v892 = vadd.f32 %v891, 1.0
  %v893 = vrcp.pop %v892
  %v894 = vmul.f32 1.0, %v893
  %v895 = vtanh.pop %v888
  %v896 = vmul.f32 %v894, %v797
  %898 = vrot.lane.b32.xlu0 %v895, 64
  %v899 = vpop.permute.xlu0 %898
  %v901 = vmul.f32 %v894, %v899
  %903 = vrot.lane.b32.xlu0 %v901, 32
  %v904 = vpop.permute.xlu0 %903
  %v906 = vadd.f32 %v896, %v904
  %v907 = vtanh.pop %v906
  %909 = vrot.lane.b32.xlu0 %v907, 64
  %v910 = vpop.permute.xlu0 %909
  %v912 = vmul.f32 %v894, %v910
  %v913 = vld [vmem:[%s4] sm:$0x1]
  %v915 = vlaneseq
  %v916 = vshrl.u32 %v915, 7
  %v917 = vsub.s32 0, %v916
  %v918 = vrot.slane %v913, %v917
  %919 = vrot.lane.b32.xlu0 %v918, 96
  %v920 = vpop.permute.xlu0 %919
  %v922 = vmul.f32 %v912, %v920
  %924 = vrot.lane.b32.xlu0 %v922, 32
  %v925 = vpop.permute.xlu0 %924
  %v927 = vsel %vm51, %v925, 0.0
  %928 = vadd.xlane.f32.xlu0 %v927
  %v929 = vpop.xlane.xlu0 %928
  %v930 = vld [vmem:[#allocation2] sm:$0x1]
  %v932 = vlaneseq
  %v933 = vshrl.u32 %v932, 7
  %v934 = vsub.s32 0, %v933
  %v935 = vrot.slane %v930, %v934
  %v937 = vadd.f32 %v929, %v935
  %vm938 = vcmask 7168
  %939 = vst.msk [vmem:[%s6] sm:$0xff] %vm938, %v937
  // Predicated region
  $region26: #{tpu_custom_call.1} parent=0 // pred_check
    _
  $region27: #{tpu_custom_call.1} parent=0 // pred_check_branch
    %941 = sbr.rel (0) target = $region29
  $region28: #{tpu_custom_call.1} parent=0 // pred_region
    _
  $region29: #{tpu_custom_call.1} parent=0 // pred_fallthru
    _
  // Predicated region
  $region30: #{tpu_custom_call.1} parent=0 // pred_check
    _
  $region31: #{tpu_custom_call.1} parent=0 // pred_check_branch
    %943 = sbr.rel (0) target = $region33
  $region32: #{tpu_custom_call.1} parent=0 // pred_region
    _
  $region33: #{tpu_custom_call.1} parent=0 // pred_fallthru
    _

</llo_original>
